<compile_context>
chip_gen: v6e
topology: v6e:2x2x1
jax: 0.10.0
libtpu: 0.0.40
codegen_flags: <defaults>
</compile_context>

<pallas_src>
import functools

import jax
import jax.numpy as jnp
from jax.experimental import pallas as pl
from jax.experimental.pallas import tpu as pltpu


def _mshf_kernel(x_ref, b_ref, m_ref, o_ref, *, dil, W):
    """x_ref: (B, H*W) image rows; b_ref: (B, 3) folded biases; m_ref: (4, H*W) masks."""
    x = x_ref[...].astype(jnp.float32)                 # (B, HW)
    HW = x.shape[1]

    m = m_ref[...]                                     # (4, HW) f32 {0,1}
    mL = m[0:1, :]                                     # valid "left neighbor"  (col >= dil)
    mR = m[1:2, :]                                     # valid "right neighbor" (col <  W-dil)
    mT = m[2:3, :]                                     # valid "up neighbor"    (row >= dil)
    mB = m[3:4, :]                                     # valid "down neighbor"  (row <  H-dil)

    sh = dil                                           # horizontal shift (lanes)
    sv = dil * W                                       # vertical shift (lanes, flattened)

    def rol(v, k):                                     # circular roll; wrap is masked away
        return pltpu.roll(v, k % HW, axis=1)

    # Shifted neighbors with zero padding (== the Conv2d zero padding).
    L = rol(x, sh) * mL                                # x[i, j-dil]
    R = rol(x, -sh) * mR                               # x[i, j+dil]
    U = rol(x, sv) * mT                                # x[i-dil, j]
    D = rol(x, -sv) * mB                               # x[i+dil, j]

    hx = L + R
    vx = U + D
    w = L - R                                          # horizontal difference (for fxy)

    wu = rol(w, sv) * mT                               # wdiff[i-dil, j]
    wd = rol(w, -sv) * mB                              # wdiff[i+dil, j]

    b = b_ref[...].astype(jnp.float32)                 # (B, 3)
    bsum_h = b[:, 0:1]                                 # 0.5*(bxx + byy)
    bdiff_h = b[:, 1:2]                                # 0.5*(bxx - byy)
    bxy = b[:, 2:3]

    s_half = 0.5 * (hx + vx) - 2.0 * x + bsum_h        # 0.5*(fxx + fyy)
    d_half = 0.5 * (hx - vx) + bdiff_h                 # 0.5*(fxx - fyy)
    fxy = (wu - wd) + bxy

    hess = s_half + jnp.sqrt(d_half * d_half + fxy * fxy)
    o_ref[...] = hess.astype(o_ref.dtype)


def _pick_block_rows(nc, row_vmem_bytes, target_bytes):
    """Rows (of N*C) per block: ~target_bytes of image data, multiple of 8 when possible."""
    rows = int(target_bytes // max(row_vmem_bytes, 1))
    if rows >= nc:
        if nc >= 16:
            # Keep >= 2 grid steps so v7x's two TensorCores both get work.
            rows = (((nc + 1) // 2) + 7) // 8 * 8
        else:
            rows = nc
    elif rows >= 8:
        rows = rows // 8 * 8
    else:
        # Huge single image: take the minimal sublane-aligned block.
        rows = min(8, nc)
    return max(1, min(rows, nc))


def mshf_forward(x, bias_xx, bias_yy, bias_xy, *, kernel=3,
                 block_rows=None, target_block_bytes=2 << 20):
    """x: (N, C, H, W); bias_*: (C,). Returns the (N, C, H, W) Hessian response."""
    N, C, H, W = x.shape
    pad = (kernel - 1) // 2
    dil = max(pad, 1)
    NC = N * C
    HW = H * W

    # Channel-independent op: fuse (N, C) and flatten (H, W) onto lanes (free reshapes).
    xf = x.reshape(NC, HW)

    # Pre-folded per-channel biases: [0.5*(bxx+byy), 0.5*(bxx-byy), bxy] per row.
    bxx = bias_xx.astype(jnp.float32)
    byy = bias_yy.astype(jnp.float32)
    bxy = bias_xy.astype(jnp.float32)
    b_chan = jnp.stack([0.5 * (bxx + byy), 0.5 * (bxx - byy), bxy], axis=1)  # (C, 3)
    b_full = jnp.tile(b_chan, (N, 1))                                        # (NC, 3)

    # Boundary-validity masks for the circular rolls (emulate conv zero padding).
    j = jnp.arange(HW, dtype=jnp.int32)
    col = j % W
    row = j // W
    masks = jnp.stack([
        col >= dil,            # left neighbor exists
        col < W - dil,         # right neighbor exists
        row >= dil,            # up neighbor exists
        row < H - dil,         # down neighbor exists
    ]).astype(jnp.float32)                                                   # (4, HW)

    # Block sizing: ~2 MiB of image rows per block (f32 temporaries dominate VMEM).
    hw_pad = ((HW + 127) // 128) * 128
    row_vmem_bytes = hw_pad * max(x.dtype.itemsize, 4)
    if block_rows is None:
        block_rows = _pick_block_rows(NC, row_vmem_bytes, target_block_bytes)
    B = int(block_rows)
    grid = (pl.cdiv(NC, B),)

    kern = functools.partial(_mshf_kernel, dil=dil, W=W)

    out = pl.pallas_call(
        kern,
        out_shape=jax.ShapeDtypeStruct((NC, HW), x.dtype),
        grid=grid,
        in_specs=[
            pl.BlockSpec((B, HW), lambda i: (i, 0)),   # image rows
            pl.BlockSpec((B, 3), lambda i: (i, 0)),    # packed biases
            pl.BlockSpec((4, HW), lambda i: (0, 0)),   # boundary masks (tiny, resident)
        ],
        out_specs=pl.BlockSpec((B, HW), lambda i: (i, 0)),
        compiler_params=pltpu.CompilerParams(
            dimension_semantics=("parallel",),
            vmem_limit_bytes=48 * 1024 * 1024,
        ),
    )(xf, b_full, masks)

    return out.reshape(N, C, H, W)


def mshf_reference(x, bias_xx, bias_yy, bias_xy, *, kernel=3):
    """Pure-JAX reference mirroring the PyTorch module (NCHW, depthwise 3x3 convs)."""
    N, C, H, W = x.shape
    pad = (kernel - 1) // 2
    dil = max(pad, 1)

    def dwconv(w_spatial, b):
        w = jnp.zeros((C, 1, 3, 3), jnp.float32).at[:, 0].set(w_spatial)
        y = jax.lax.conv_general_dilated(
            x.astype(jnp.float32), w, window_strides=(1, 1),
            padding=((pad, pad), (pad, pad)),
            rhs_dilation=(dil, dil),
            dimension_numbers=("NCHW", "OIHW", "NCHW"),
            feature_group_count=C)
        return y + b.reshape(1, C, 1, 1)

    wxx = jnp.array([[0, 0, 0], [1, -2, 1], [0, 0, 0]], jnp.float32)
    wyy = jnp.array([[0, 1, 0], [0, -2, 0], [0, 1, 0]], jnp.float32)
    wxy = jnp.array([[1, 0, -1], [0, 0, 0], [-1, 0, 1]], jnp.float32)

    fxx = dwconv(wxx, bias_xx)
    fyy = dwconv(wyy, bias_yy)
    fxy = dwconv(wxy, bias_xy)
    return (fxx + fyy + jnp.sqrt((fxx - fyy) ** 2 + 4.0 * fxy ** 2)) / 2.0


if __name__ == "__main__":
    master_key = jax.random.PRNGKey(0)

    def run_case(case_key, N, C, H, W, kernel, **fw_kwargs):
        k_x, k_bxx, k_byy, k_bxy = jax.random.split(case_key, 4)
        x = jax.random.normal(k_x, (N, C, H, W), dtype=jnp.float32)
        # Conv2d biases are NOT zeroed by the module (only weights are); use
        # deterministic random per-channel biases like the default init would.
        bias_xx = jax.random.normal(k_bxx, (C,), dtype=jnp.float32) * 0.1
        bias_yy = jax.random.normal(k_byy, (C,), dtype=jnp.float32) * 0.1
        bias_xy = jax.random.normal(k_bxy, (C,), dtype=jnp.float32) * 0.1

        out = jax.block_until_ready(
            mshf_forward(x, bias_xx, bias_yy, bias_xy, kernel=kernel, **fw_kwargs))
        ref = mshf_reference(x, bias_xx, bias_yy, bias_xy, kernel=kernel)
        assert out.shape == (N, C, H, W)
        assert jnp.allclose(out, ref, atol=1e-4, rtol=1e-4), (
            f"mismatch vs reference for shape {(N, C, H, W)}, kernel={kernel}")

    keys = jax.random.split(master_key, 3)
    # Primary case: MSHF(n_channels=4), default kernel=3, 16x16 images.
    run_case(keys[0], 2, 4, 16, 16, 3)
    # kernel=5 (pad = dilation = 2), non-square image, H*W not a multiple of 128.
    run_case(keys[1], 3, 5, 12, 20, 5)
    # Partial last block: NC=20 with a forced 8-row block (grid=3, clipped tail).
    run_case(keys[2], 5, 4, 16, 16, 3, block_rows=8)

    print("KERNEL_OK")
</pallas_src>

<mosaic_0001>
module attributes {stable_mosaic.version = 11 : i64} {
  func.func @_mshf_kernel(%arg0: i32, %arg1: memref<8x256xf32, #tpu.memory_space<vmem>>, %arg2: memref<8x3xf32, #tpu.memory_space<vmem>>, %arg3: memref<4x256xf32, #tpu.memory_space<vmem>>, %arg4: memref<8x256xf32, #tpu.memory_space<vmem>>) attributes {dimension_semantics = [#tpu.dimension_semantics<parallel>], iteration_bounds = array<i64: 1>, scalar_prefetch = 0 : i64, scratch_operands = 0 : i64, tpu.core_type = #tpu.core_type<tc>, window_params = [{transform_indices = @transform_0, window_bounds = array<i64: 8, 256>}, {transform_indices = @transform_1, window_bounds = array<i64: 8, 3>}, {pipeline_mode = #tpu.pipeline_mode<synchronous>, transform_indices = @transform_2, window_bounds = array<i64: 4, 256>}, {transform_indices = @transform_3, window_bounds = array<i64: 8, 256>}]} {
    %c0 = arith.constant 0 : index
    %c0_0 = arith.constant 0 : index
    %0 = vector.load %arg1[%c0, %c0_0] : memref<8x256xf32, #tpu.memory_space<vmem>>, vector<8x256xf32>
    %c0_1 = arith.constant 0 : index
    %c0_2 = arith.constant 0 : index
    %1 = vector.load %arg3[%c0_1, %c0_2] : memref<4x256xf32, #tpu.memory_space<vmem>>, vector<4x256xf32>
    %2 = vector.extract_strided_slice %1 {offsets = [0, 0], sizes = [1, 256], strides = [1, 1]} : vector<4x256xf32> to vector<1x256xf32>
    %3 = vector.extract_strided_slice %1 {offsets = [1, 0], sizes = [1, 256], strides = [1, 1]} : vector<4x256xf32> to vector<1x256xf32>
    %4 = vector.extract_strided_slice %1 {offsets = [2, 0], sizes = [1, 256], strides = [1, 1]} : vector<4x256xf32> to vector<1x256xf32>
    %5 = vector.extract_strided_slice %1 {offsets = [3, 0], sizes = [1, 256], strides = [1, 1]} : vector<4x256xf32> to vector<1x256xf32>
    %c1_i32 = arith.constant 1 : i32
    %6 = tpu.dynamic_rotate %0 by %c1_i32 dim 1 : vector<8x256xf32>, i32 -> vector<8x256xf32>
    %7 = vector.broadcast %2 : vector<1x256xf32> to vector<8x256xf32>
    %8 = arith.mulf %6, %7 : vector<8x256xf32>
    %c255_i32 = arith.constant 255 : i32
    %9 = tpu.dynamic_rotate %0 by %c255_i32 dim 1 : vector<8x256xf32>, i32 -> vector<8x256xf32>
    %10 = vector.broadcast %3 : vector<1x256xf32> to vector<8x256xf32>
    %11 = arith.mulf %9, %10 : vector<8x256xf32>
    %c16_i32 = arith.constant 16 : i32
    %12 = tpu.dynamic_rotate %0 by %c16_i32 dim 1 : vector<8x256xf32>, i32 -> vector<8x256xf32>
    %13 = vector.broadcast %4 : vector<1x256xf32> to vector<8x256xf32>
    %14 = arith.mulf %12, %13 : vector<8x256xf32>
    %c240_i32 = arith.constant 240 : i32
    %15 = tpu.dynamic_rotate %0 by %c240_i32 dim 1 : vector<8x256xf32>, i32 -> vector<8x256xf32>
    %16 = vector.broadcast %5 : vector<1x256xf32> to vector<8x256xf32>
    %17 = arith.mulf %15, %16 : vector<8x256xf32>
    %18 = arith.addf %8, %11 : vector<8x256xf32>
    %19 = arith.addf %14, %17 : vector<8x256xf32>
    %20 = arith.subf %8, %11 : vector<8x256xf32>
    %c16_i32_3 = arith.constant 16 : i32
    %21 = tpu.dynamic_rotate %20 by %c16_i32_3 dim 1 : vector<8x256xf32>, i32 -> vector<8x256xf32>
    %22 = vector.broadcast %4 : vector<1x256xf32> to vector<8x256xf32>
    %23 = arith.mulf %21, %22 : vector<8x256xf32>
    %c240_i32_4 = arith.constant 240 : i32
    %24 = tpu.dynamic_rotate %20 by %c240_i32_4 dim 1 : vector<8x256xf32>, i32 -> vector<8x256xf32>
    %25 = vector.broadcast %5 : vector<1x256xf32> to vector<8x256xf32>
    %26 = arith.mulf %24, %25 : vector<8x256xf32>
    %c0_5 = arith.constant 0 : index
    %c0_6 = arith.constant 0 : index
    %27 = vector.load %arg2[%c0_5, %c0_6] : memref<8x3xf32, #tpu.memory_space<vmem>>, vector<8x3xf32>
    %28 = vector.extract_strided_slice %27 {offsets = [0, 0], sizes = [8, 1], strides = [1, 1]} : vector<8x3xf32> to vector<8x1xf32>
    %29 = vector.extract_strided_slice %27 {offsets = [0, 1], sizes = [8, 1], strides = [1, 1]} : vector<8x3xf32> to vector<8x1xf32>
    %30 = vector.extract_strided_slice %27 {offsets = [0, 2], sizes = [8, 1], strides = [1, 1]} : vector<8x3xf32> to vector<8x1xf32>
    %31 = arith.addf %18, %19 : vector<8x256xf32>
    %cst = arith.constant 5.000000e-01 : f32
    %32 = vector.broadcast %cst : f32 to vector<8x256xf32>
    %33 = arith.mulf %32, %31 : vector<8x256xf32>
    %cst_7 = arith.constant 2.000000e+00 : f32
    %34 = vector.broadcast %cst_7 : f32 to vector<8x256xf32>
    %35 = arith.mulf %34, %0 : vector<8x256xf32>
    %36 = arith.subf %33, %35 : vector<8x256xf32>
    %37 = vector.broadcast %28 : vector<8x1xf32> to vector<8x256xf32>
    %38 = arith.addf %36, %37 : vector<8x256xf32>
    %39 = arith.subf %18, %19 : vector<8x256xf32>
    %cst_8 = arith.constant 5.000000e-01 : f32
    %40 = vector.broadcast %cst_8 : f32 to vector<8x256xf32>
    %41 = arith.mulf %40, %39 : vector<8x256xf32>
    %42 = vector.broadcast %29 : vector<8x1xf32> to vector<8x256xf32>
    %43 = arith.addf %41, %42 : vector<8x256xf32>
    %44 = arith.subf %23, %26 : vector<8x256xf32>
    %45 = vector.broadcast %30 : vector<8x1xf32> to vector<8x256xf32>
    %46 = arith.addf %44, %45 : vector<8x256xf32>
    %47 = arith.mulf %43, %43 : vector<8x256xf32>
    %48 = arith.mulf %46, %46 : vector<8x256xf32>
    %49 = arith.addf %47, %48 : vector<8x256xf32>
    %50 = math.sqrt %49 : vector<8x256xf32>
    %51 = arith.addf %38, %50 : vector<8x256xf32>
    %c0_9 = arith.constant 0 : index
    %c0_10 = arith.constant 0 : index
    %52 = vector.load %arg4[%c0_9, %c0_10] : memref<8x256xf32, #tpu.memory_space<vmem>>, vector<8x256xf32>
    tpu.vector_store %arg4[%c0_9, %c0_10], %51 {strides = array<i32>} : memref<8x256xf32, #tpu.memory_space<vmem>>, vector<8x256xf32>,
    return
  }
  func.func @transform_0(%arg0: i32) -> (i32, i32) {
    %c0_i32 = arith.constant 0 : i32
    %c0_i32_0 = arith.constant 0 : i32
    return %arg0, %c0_i32 : i32, i32
  }
  func.func @transform_1(%arg0: i32) -> (i32, i32) {
    %c0_i32 = arith.constant 0 : i32
    %c0_i32_0 = arith.constant 0 : i32
    return %arg0, %c0_i32 : i32, i32
  }
  func.func @transform_2(%arg0: i32) -> (i32, i32) {
    %c0_i32 = arith.constant 0 : i32
    %c0_i32_0 = arith.constant 0 : i32
    %c0_i32_1 = arith.constant 0 : i32
    return %c0_i32, %c0_i32_0 : i32, i32
  }
  func.func @transform_3(%arg0: i32) -> (i32, i32) {
    %c0_i32 = arith.constant 0 : i32
    %c0_i32_0 = arith.constant 0 : i32
    return %arg0, %c0_i32 : i32, i32
  }
}

</mosaic_0001>

<llo_original>
// kernel: tpu_custom_call.1
$region0: #{tpu_custom_call.1}
  #allocation0 [shape = 'u32[]', space=smem, size = 0x4, offset = 0x4, fixed_abs, tag = 'smem constant byte address 0x4 - core index']
  #allocation1 [shape = 'u32[144,128]{1,0:T(1,128)}', space=vmem, size = 0x12000, scoped, tag = 'internal scratch']
  %s0 = inlined_call_operand.hbm [shape: f32[8,256], index: 0, kind: input, shape index: {}]
  %s1 = inlined_call_operand.vmem [shape: f32[8,3], index: 1, kind: input, shape index: {}]
  %s2 = inlined_call_operand.vmem [shape: f32[4,256], index: 2, kind: input, shape index: {}]
  %s3 = inlined_call_operand.hbm [shape: f32[8,256], index: 3, kind: output, shape index: {}]
  %s4 = sld [smem:[#allocation0]]
  $region26: #{tpu_custom_call.1} parent=0
    _
  %s6 = ssub.s32 1, %s4
  %s7 = scalar_select 0, %s6, %s4
  $region1: #{tpu_custom_call.1} parent=0
    #allocation2 [shape = 'u8[8192]{0}', space=vmem, size = 0x2000, scoped, tag = 'input window, operand 0, single buffered']
    #allocation3 [shape = 's32[1]{0}', space=sflag, size = 0x4, scoped, tag = 'scoped memory for tpu_custom_call.1']
    #allocation4 [shape = 's32[1]{0}', space=sflag, size = 0x4, scoped, tag = 'scoped memory for tpu_custom_call.1']
    #allocation5 [shape = 'u8[8192]{0}', space=vmem, size = 0x2000, scoped, tag = 'output window, operand 0, single buffered']
    %8 = vsyncpa [#allocation3], 0
    %9 = vsyncpa [#allocation4], 0
    // Predicated region
    $region2: #{tpu_custom_call.1} parent=1 // pred_check
      _
    $region3: #{tpu_custom_call.1} parent=1 // pred_check_branch
      %11 = sbr.rel (0) target = $region5
    $region4: #{tpu_custom_call.1} parent=1 // pred_region
      %s13 = ssub.s32 256, 256
      %14 = vsyncadd [#allocation3], %s13
      %s16 = sshll.u32 [#allocation2], 4
      %s17 = int_to_ptr.vmem [resolvable:$true] %s16
      %19 = dma.hbm_to_vmem [thread:$0]  %s0, 256, %s17, [#allocation3]
    $region5: #{tpu_custom_call.1} parent=1 // pred_fallthru
      _
    // Predicated region
    $region6: #{tpu_custom_call.1} parent=1 // pred_check
      _
    $region7: #{tpu_custom_call.1} parent=1 // pred_check_branch
      %21 = sbr.rel (0) target = $region9
    $region8: #{tpu_custom_call.1} parent=1 // pred_region
      _
    $region9: #{tpu_custom_call.1} parent=1 // pred_fallthru
      _
    // Predicated region
    $region10: #{tpu_custom_call.1} parent=1 // pred_check
      _
    $region11: #{tpu_custom_call.1} parent=1 // pred_check_branch
      %23 = sbr.rel (0) target = $region13
    $region12: #{tpu_custom_call.1} parent=1 // pred_region
      _
    $region13: #{tpu_custom_call.1} parent=1 // pred_fallthru
      _
    // Predicated region
    $region14: #{tpu_custom_call.1} parent=1 // pred_check
      _
    $region15: #{tpu_custom_call.1} parent=1 // pred_check_branch
      %25 = sbr.rel (0) target = $region17
    $region16: #{tpu_custom_call.1} parent=1 // pred_region
      %26 = dma.done [#allocation3], 256
    $region17: #{tpu_custom_call.1} parent=1 // pred_fallthru
      _
    %v27 = vld [vmem:[#allocation2] sm:$0xff]
    %v28 = vld [vmem:[#allocation2 + $0x8] sm:$0xff]
    %v29 = vld [vmem:[%s2] sm:$0xff]
    %30 = vrot.lane.b32.xlu0 %v27, 1
    %v31 = vpop.permute.xlu0 %30
    %32 = vrot.lane.b32.xlu0 %v28, 1
    %v33 = vpop.permute.xlu0 %32
    %v34 = vlaneseq
    %v35 = vand.u32 %v34, 127
    %vm36 = vcmp.lt.s32.totalorder %v35, 1
    %v37 = vsel %vm36, %v31, %v33
    %v38 = vsel %vm36, %v33, %v31
    %v40 = vlaneseq
    %v41 = vshrl.u32 %v40, 7
    %v42 = vsub.s32 0, %v41
    %v43 = vrot.slane %v29, %v42
    %v44 = vlaneseq
    %v45 = vshrl.u32 %v44, 7
    %v46 = vsub.s32 4, %v45
    %v47 = vrot.slane %v29, %v46
    %v50 = vlaneseq
    %v51 = vshrl.u32 %v50, 7
    %v52 = vsub.s32 0, %v51
    %v53 = vrot.slane %v43, %v52
    %v54 = vlaneseq
    %v55 = vshrl.u32 %v54, 7
    %v56 = vsub.s32 0, %v55
    %v57 = vrot.slane %v47, %v56
    %v58 = vmul.f32 %v38, %v53
    %v59 = vmul.f32 %v37, %v57
    %60 = vrot.lane.b32.xlu0 %v27, 127
    %v61 = vpop.permute.xlu0 %60
    %62 = vrot.lane.b32.xlu0 %v28, 127
    %v63 = vpop.permute.xlu0 %62
    %vm64 = vcmp.lt.s32.totalorder %v35, 127
    %v65 = vsel %vm64, %v61, %v63
    %v66 = vsel %vm64, %v63, %v61
    %v67 = vlaneseq
    %v68 = vshrl.u32 %v67, 7
    %v69 = vsub.s32 1, %v68
    %v70 = vrot.slane %v29, %v69
    %v71 = vlaneseq
    %v72 = vshrl.u32 %v71, 7
    %v73 = vsub.s32 5, %v72
    %v74 = vrot.slane %v29, %v73
    %v77 = vlaneseq
    %v78 = vshrl.u32 %v77, 7
    %v79 = vsub.s32 1, %v78
    %v80 = vrot.slane %v70, %v79
    %v81 = vlaneseq
    %v82 = vshrl.u32 %v81, 7
    %v83 = vsub.s32 1, %v82
    %v84 = vrot.slane %v74, %v83
    %v85 = vmul.f32 %v65, %v80
    %v86 = vmul.f32 %v66, %v84
    %87 = vrot.lane.b32.xlu0 %v27, 16
    %v88 = vpop.permute.xlu0 %87
    %89 = vrot.lane.b32.xlu0 %v28, 16
    %v90 = vpop.permute.xlu0 %89
    %vm91 = vcmp.lt.s32.totalorder %v35, 16
    %v92 = vsel %vm91, %v88, %v90
    %v93 = vsel %vm91, %v90, %v88
    %v94 = vlaneseq
    %v95 = vshrl.u32 %v94, 7
    %v96 = vsub.s32 2, %v95
    %v97 = vrot.slane %v29, %v96
    %v98 = vlaneseq
    %v99 = vshrl.u32 %v98, 7
    %v100 = vsub.s32 6, %v99
    %v101 = vrot.slane %v29, %v100
    %v104 = vlaneseq
    %v105 = vshrl.u32 %v104, 7
    %v106 = vsub.s32 2, %v105
    %v107 = vrot.slane %v97, %v106
    %v108 = vlaneseq
    %v109 = vshrl.u32 %v108, 7
    %v110 = vsub.s32 2, %v109
    %v111 = vrot.slane %v101, %v110
    %v112 = vmul.f32 %v93, %v107
    %v113 = vmul.f32 %v92, %v111
    %114 = vrot.lane.b32.xlu0 %v27, 112
    %v115 = vpop.permute.xlu0 %114
    %116 = vrot.lane.b32.xlu0 %v28, 112
    %v117 = vpop.permute.xlu0 %116
    %vm118 = vcmp.lt.s32.totalorder %v35, 112
    %v119 = vsel %vm118, %v115, %v117
    %v120 = vsel %vm118, %v117, %v115
    %v121 = vlaneseq
    %v122 = vshrl.u32 %v121, 7
    %v123 = vsub.s32 3, %v122
    %v124 = vrot.slane %v29, %v123
    %v125 = vlaneseq
    %v126 = vshrl.u32 %v125, 7
    %v127 = vsub.s32 7, %v126
    %v128 = vrot.slane %v29, %v127
    %v131 = vlaneseq
    %v132 = vshrl.u32 %v131, 7
    %v133 = vsub.s32 3, %v132
    %v134 = vrot.slane %v124, %v133
    %v135 = vlaneseq
    %v136 = vshrl.u32 %v135, 7
    %v137 = vsub.s32 3, %v136
    %v138 = vrot.slane %v128, %v137
    %v139 = vmul.f32 %v119, %v134
    %v140 = vmul.f32 %v120, %v138
    %v141 = vadd.f32 %v58, %v85
    %v142 = vadd.f32 %v59, %v86
    %v143 = vadd.f32 %v112, %v139
    %v144 = vadd.f32 %v113, %v140
    %v145 = vsub.f32 %v58, %v85
    %v146 = vsub.f32 %v59, %v86
    %147 = vrot.lane.b32.xlu0 %v145, 16
    %v148 = vpop.permute.xlu0 %147
    %149 = vrot.lane.b32.xlu0 %v146, 16
    %v150 = vpop.permute.xlu0 %149
    %v151 = vsel %vm91, %v148, %v150
    %v152 = vsel %vm91, %v150, %v148
    %v153 = vmul.f32 %v152, %v107
    %v154 = vmul.f32 %v151, %v111
    %155 = vrot.lane.b32.xlu0 %v145, 112
    %v156 = vpop.permute.xlu0 %155
    %157 = vrot.lane.b32.xlu0 %v146, 112
    %v158 = vpop.permute.xlu0 %157
    %v159 = vsel %vm118, %v156, %v158
    %v160 = vsel %vm118, %v158, %v156
    %v161 = vmul.f32 %v159, %v134
    %v162 = vmul.f32 %v160, %v138
    %v163 = vld [vmem:[%s1] sm:$0xff]
    %v164 = vadd.f32 %v141, %v143
    %v165 = vadd.f32 %v142, %v144
    %v166 = vmul.f32 %v164, 0.5
    %v167 = vmul.f32 %v165, 0.5
    %v168 = vmul.f32 %v27, 2.0
    %v169 = vmul.f32 %v28, 2.0
    %v170 = vsub.f32 %v166, %v168
    %v171 = vsub.f32 %v167, %v169
    %173 = vset.pattern.permute.xlu0 0
    %174 = vperm.xlu0 %173, %v163
    %v175 = vpop.permute.xlu0 %174
    %v177 = vadd.f32 %v170, %v175
    %v178 = vadd.f32 %v171, %v175
    %v179 = vsub.f32 %v141, %v143
    %v180 = vsub.f32 %v142, %v144
    %v181 = vmul.f32 %v179, 0.5
    %v182 = vmul.f32 %v180, 0.5
    %183 = vset.pattern.permute.xlu0 1
    %184 = vperm.xlu0 %183, %v163
    %v185 = vpop.permute.xlu0 %184
    %v187 = vadd.f32 %v181, %v185
    %v188 = vadd.f32 %v182, %v185
    %v189 = vsub.f32 %v153, %v161
    %v190 = vsub.f32 %v154, %v162
    %191 = vset.pattern.permute.xlu0 2
    %192 = vperm.xlu0 %191, %v163
    %v193 = vpop.permute.xlu0 %192
    %v195 = vadd.f32 %v189, %v193
    %v196 = vadd.f32 %v190, %v193
    %v197 = vmul.f32 %v187, %v187
    %v198 = vmul.f32 %v188, %v188
    %v199 = vmul.f32 %v195, %v195
    %v200 = vmul.f32 %v196, %v196
    %v201 = vadd.f32 %v197, %v199
    %v202 = vadd.f32 %v198, %v200
    %v203 = vrsqrt.pop %v201
    %v204 = vmul.f32 %v201, %v203
    %vm205 = vcmp.eq.f32.partialorder %v201, inf
    %v206 = vsel %vm205, %v201, %v204
    %vm207 = vcmp.eq.f32.partialorder %v201, 0.0
    %v208 = vand.u32 %v201, 2147483648
    %v209 = vsel %vm207, %v208, %v206
    %v210 = vrsqrt.pop %v202
    %v211 = vmul.f32 %v202, %v210
    %vm212 = vcmp.eq.f32.partialorder %v202, inf
    %v213 = vsel %vm212, %v202, %v211
    %vm214 = vcmp.eq.f32.partialorder %v202, 0.0
    %v215 = vand.u32 %v202, 2147483648
    %v216 = vsel %vm214, %v215, %v213
    %v217 = vadd.f32 %v177, %v209
    %v218 = vadd.f32 %v178, %v216
    %219 = vst [vmem:[#allocation5] sm:$0xff] %v217
    %220 = vst [vmem:[#allocation5 + $0x8] sm:$0xff] %v218
    // Predicated region
    $region18: #{tpu_custom_call.1} parent=1 // pred_check
      _
    $region19: #{tpu_custom_call.1} parent=1 // pred_check_branch
      %222 = sbr.rel (0) target = $region21
    $region20: #{tpu_custom_call.1} parent=1 // pred_region
      %s224 = ssub.s32 256, 256
      %225 = vsyncadd [#allocation4], %s224
      %s227 = sshll.u32 [#allocation5], 4
      %s228 = int_to_ptr.vmem [resolvable:$true] %s227
      %230 = dma.vmem_to_hbm [thread:$0]  %s228, 256, %s3, [#allocation4]
    $region21: #{tpu_custom_call.1} parent=1 // pred_fallthru
      _
    // Predicated region
    $region22: #{tpu_custom_call.1} parent=1 // pred_check
      _
    $region23: #{tpu_custom_call.1} parent=1 // pred_check_branch
      %232 = sbr.rel (0) target = $region25
    $region24: #{tpu_custom_call.1} parent=1 // pred_region
      %233 = dma.done [#allocation4], 256
    $region25: #{tpu_custom_call.1} parent=1 // pred_fallthru
      _
    %234 = vsyncpa [#allocation3], 1
    %235 = vsyncpa [#allocation4], 1

</llo_original>
